<compile_context>
chip_gen: v5e
topology: v5e:2x2
jax: 0.10.0
libtpu: 0.0.40
codegen_flags: <defaults>
</compile_context>

<pallas_src>
import functools
import math

import jax
import jax.numpy as jnp
from jax import lax
from jax.experimental import pallas as pl
from jax.experimental.pallas import tpu as pltpu


# ---------------------------------------------------------------------------
# Kernel
# ---------------------------------------------------------------------------
def attention_kernel(x_ref, w_ref, ctx_ref, scores_ref, *, upcast_to_f32):
    """Attention over one block of BB batch rows.

    x_ref      : (BB, T, H)  block of the LSTM output            (VMEM)
    w_ref      : (1, H)      attention weight vector             (VMEM)
    ctx_ref    : (BB, H)     context vectors, sublane-dense      (VMEM)
    scores_ref : (BB, T)     softmax scores, T lane-dense, f32   (VMEM)
    """
    x = x_ref[...]                                              # (BB, T, H)
    if upcast_to_f32:
        # <= v5 chips have no bf16 VPU/EUP path: widen once up front.
        x = x.astype(jnp.float32)
    w = w_ref[...].astype(x.dtype).reshape(1, 1, -1)            # (1, 1, H)

    # attention scores = x @ W  ->  lane-dense (BB, T).
    # Per-row contraction over H (the lane axis) with f32 accumulation; the
    # multiply stays in the input dtype (bf16 on v6e/v7x, f32 otherwise).
    s = jnp.sum(x * w, axis=-1, dtype=jnp.float32)              # (BB, T)

    # softmax over the time axis (dim=1 of the original (B, T, 1) tensor);
    # T sits on lanes, so max/sum are lane reductions and exp fills vregs.
    m = jnp.max(s, axis=-1, keepdims=True)                      # (BB, 1)
    e = jnp.exp(s - m)                                          # (BB, T)
    denom = jnp.sum(e, axis=-1, keepdims=True)                  # (BB, 1)
    p = e / denom                                               # exact softmax
    scores_ref[...] = p.astype(scores_ref.dtype)

    # context[b] = sum_t p[b, t] * x[b, t, :]  ==  einsum('bt,bth->bh').
    # Implemented as a batched (M=1, K=T, N=H) MXU matmul with f32
    # accumulation, avoiding the (BB, T, H) broadcast temporary and the
    # T lane->sublane relayout of p that sum(x * p[:, :, None], 1) incurs.
    p3 = p[:, None, :].astype(x.dtype)                          # (BB, 1, T)
    ctx = lax.dot_general(
        p3, x,
        dimension_numbers=(((2,), (1,)), ((0,), (0,))),
        preferred_element_type=jnp.float32)                     # (BB, 1, H)
    ctx_ref[...] = ctx[:, 0, :].astype(ctx_ref.dtype)


# ---------------------------------------------------------------------------
# Blocking / generation-aware budgeting helpers
# ---------------------------------------------------------------------------
def _device_kind():
    try:
        return jax.devices()[0].device_kind.lower()
    except Exception:
        return ""


def _needs_f32_upcast(kind):
    # v2-v5 have no bf16 VPU/EUP path; v6e/v7x do.
    return any(tag in kind for tag in ("v2", "v3", "v4", "v5"))


def _tile_budget_bytes(kind):
    """Budget for the raw (BB, T, H) input block.

    Real per-step VMEM footprint is ~5x this (2x double-buffered input, one
    f32 tile-sized temporary, double-buffered outputs), so these keep us well
    inside the default scoped-VMEM limit of each generation.  ~1-4 MiB tiles
    already sit at ~85% of the HBM roofline on this mem-bound op.
    """
    if _needs_f32_upcast(kind):
        return int(1.5 * (1 << 20))       # v5e & older: 16 MiB default scoped VMEM
    if "v7" in kind:
        return 3 << 20                    # v7x: 64 MiB physical / 32 MiB default
    return 4 << 20                        # v6e: 128 MiB physical / 32 MiB default


def _round_up(x, m):
    return ((x + m - 1) // m) * m


def _choose_blocking(B, T, H, itemsize, kind):
    """Pick (BB, num_blocks) with BB a multiple of 8 and BB*num_blocks >= B."""
    budget = _tile_budget_bytes(kind)
    row_bytes = T * H * itemsize
    # Largest multiple-of-8 batch block whose input tile fits the budget.
    bb_cap = max(8, (budget // row_bytes) // 8 * 8)
    # TODO(synk): if even BB=8 exceeds the budget (very large T*H), block over
    # T as a second grid axis with an online softmax instead of growing BB.

    n = max(1, math.ceil(B / bb_cap))
    if B > 8:
        n = max(n, 2)                     # >=2 blocks: pipelining + v7x 2-TC split
    if "v7" in kind and n > 1 and n % 2 == 1:
        n += 1                            # even block count balances the 2 TensorCores

    bb = max(8, _round_up(math.ceil(B / n), 8))   # <= bb_cap by construction
    return bb, n


# ---------------------------------------------------------------------------
# Wrapper
# ---------------------------------------------------------------------------
def attention_forward(lstm_output, attention_weights):
    """Pallas wrapper. lstm_output: (B, T, H); attention_weights: (H, 1)."""
    B, T, H = lstm_output.shape
    in_dtype = lstm_output.dtype
    itemsize = jnp.dtype(in_dtype).itemsize
    w_itemsize = jnp.dtype(attention_weights.dtype).itemsize

    kind = _device_kind()
    BB, num_blocks = _choose_blocking(B, T, H, itemsize, kind)
    B_pad = BB * num_blocks

    x = lstm_output
    if B_pad != B:
        # Zero rows: softmax over zeros is finite (uniform); sliced off below.
        x = jnp.pad(x, ((0, B_pad - B), (0, 0), (0, 0)))
    w2 = attention_weights.reshape(1, H)                 # glue reshape only

    upcast_to_f32 = (in_dtype != jnp.float32) and _needs_f32_upcast(kind)
    kernel = functools.partial(attention_kernel, upcast_to_f32=upcast_to_f32)

    # Advisory cost: this op is HBM-bound (one pass over lstm_output).
    cost = pl.CostEstimate(
        flops=int(4 * B_pad * T * H),
        transcendentals=int(B_pad * T),
        bytes_accessed=int(B_pad * T * H * itemsize      # read x
                           + H * w_itemsize              # read W
                           + B_pad * H * itemsize        # write context
                           + B_pad * T * 4),             # write f32 scores
    )

    ctx, scores_bt = pl.pallas_call(
        kernel,
        grid=(num_blocks,),
        in_specs=[
            # BB batch rows per grid step: one large contiguous DMA per step.
            pl.BlockSpec((BB, T, H), lambda b: (b, 0, 0)),
            pl.BlockSpec((1, H), lambda b: (0, 0)),
        ],
        out_specs=(
            # Sublane-dense context slab and lane-dense scores slab.
            pl.BlockSpec((BB, H), lambda b: (b, 0)),
            pl.BlockSpec((BB, T), lambda b: (b, 0)),
        ),
        out_shape=(
            jax.ShapeDtypeStruct((B_pad, H), in_dtype),
            jax.ShapeDtypeStruct((B_pad, T), jnp.float32),
        ),
        compiler_params=pltpu.CompilerParams(
            dimension_semantics=("parallel",),
            vmem_limit_bytes=32 << 20,   # <= physical VMEM on every generation
        ),
        cost_estimate=cost,
    )(x, w2)

    # Drop batch padding; restore the PyTorch (B, T, 1) scores shape for free.
    context_vector = ctx[:B]
    attention_scores = scores_bt[:B, :, None]
    return context_vector, attention_scores


def attention_reference(lstm_output, attention_weights):
    """Plain-JAX reference matching the PyTorch forward exactly."""
    s = jnp.matmul(lstm_output, attention_weights)       # (B, T, 1)
    s = jax.nn.softmax(s, axis=1)                        # softmax over T
    ctx = jnp.sum(lstm_output * s, axis=1)               # (B, H)
    return ctx, s


if __name__ == "__main__":
    # hidden_dim=128 as in the PyTorch spec; batch chosen so the kernel
    # exercises the batched (BB=8, 2-block) grid path while staying small.
    B, T, H = 16, 16, 128
    key = jax.random.PRNGKey(0)
    k_x, k_w = jax.random.split(key)

    lstm_output = jax.random.normal(k_x, (B, T, H), dtype=jnp.float32)
    # nn.Parameter(torch.randn(hidden_dim, 1)) -> deterministic synthetic init
    attention_weights = jax.random.normal(k_w, (H, 1), dtype=jnp.float32)

    ctx, scores = attention_forward(lstm_output, attention_weights)
    ctx = jax.block_until_ready(ctx)
    scores = jax.block_until_ready(scores)

    ctx_ref, scores_ref = attention_reference(lstm_output, attention_weights)

    assert ctx.shape == (B, H)
    assert scores.shape == (B, T, 1)
    assert jnp.allclose(ctx, ctx_ref, atol=1e-5, rtol=1e-5)
    assert jnp.allclose(scores, scores_ref, atol=1e-5, rtol=1e-5)

    print("KERNEL_OK")
</pallas_src>

<mosaic_0001>
module attributes {stable_mosaic.version = 11 : i64} {
  func.func @attention_kernel(%arg0: i32, %arg1: memref<8x16x128xf32, #tpu.memory_space<vmem>>, %arg2: memref<1x128xf32, #tpu.memory_space<vmem>>, %arg3: memref<8x128xf32, #tpu.memory_space<vmem>>, %arg4: memref<8x16xf32, #tpu.memory_space<vmem>>) attributes {dimension_semantics = [#tpu.dimension_semantics<parallel>], iteration_bounds = array<i64: 2>, scalar_prefetch = 0 : i64, scratch_operands = 0 : i64, tpu.core_type = #tpu.core_type<tc>, window_params = [{transform_indices = @transform_0, window_bounds = array<i64: 8, 16, 128>}, {pipeline_mode = #tpu.pipeline_mode<synchronous>, transform_indices = @transform_1, window_bounds = array<i64: 1, 128>}, {transform_indices = @transform_2, window_bounds = array<i64: 8, 128>}, {transform_indices = @transform_3, window_bounds = array<i64: 8, 16>}]} {
    %c0 = arith.constant 0 : index
    %c0_0 = arith.constant 0 : index
    %c0_1 = arith.constant 0 : index
    %0 = vector.load %arg1[%c0, %c0_0, %c0_1] : memref<8x16x128xf32, #tpu.memory_space<vmem>>, vector<8x16x128xf32>
    %c0_2 = arith.constant 0 : index
    %c0_3 = arith.constant 0 : index
    %1 = vector.load %arg2[%c0_2, %c0_3] : memref<1x128xf32, #tpu.memory_space<vmem>>, vector<1x128xf32>
    %2 = vector.shape_cast %1 : vector<1x128xf32> to vector<1x1x128xf32>
    %3 = vector.broadcast %2 : vector<1x1x128xf32> to vector<8x16x128xf32>
    %4 = arith.mulf %0, %3 : vector<8x16x128xf32>
    %cst = arith.constant dense<0.000000e+00> : vector<8x16xf32>
    %5 = vector.multi_reduction <add>, %4, %cst [2] : vector<8x16x128xf32> to vector<8x16xf32>
    %cst_4 = arith.constant dense<0xFF800000> : vector<8xf32>
    %6 = vector.multi_reduction <maximumf>, %5, %cst_4 [1] : vector<8x16xf32> to vector<8xf32>
    %7 = vector.shape_cast %6 : vector<8xf32> to vector<8x1xf32>
    %8 = vector.broadcast %7 : vector<8x1xf32> to vector<8x16xf32>
    %9 = arith.subf %5, %8 : vector<8x16xf32>
    %10 = math.exp %9 : vector<8x16xf32>
    %cst_5 = arith.constant dense<0.000000e+00> : vector<8xf32>
    %11 = vector.multi_reduction <add>, %10, %cst_5 [1] : vector<8x16xf32> to vector<8xf32>
    %12 = vector.shape_cast %11 : vector<8xf32> to vector<8x1xf32>
    %13 = vector.broadcast %12 : vector<8x1xf32> to vector<8x16xf32>
    %14 = arith.divf %10, %13 : vector<8x16xf32>
    %c0_6 = arith.constant 0 : index
    %c0_7 = arith.constant 0 : index
    %15 = vector.load %arg4[%c0_6, %c0_7] : memref<8x16xf32, #tpu.memory_space<vmem>>, vector<8x16xf32>
    tpu.vector_store %arg4[%c0_6, %c0_7], %14 {strides = array<i32>} : memref<8x16xf32, #tpu.memory_space<vmem>>, vector<8x16xf32>,
    %16 = vector.shape_cast %14 : vector<8x16xf32> to vector<8x1x16xf32>
    %cst_8 = arith.constant dense<0.000000e+00> : vector<8x1x128xf32>
    %17 = tpu.matmul %16, %0, %cst_8 {dimension_numbers = #tpu.dot_dimension_numbers<[2], [1], [1], [2], [0, 0, 0, 1, 1, 2], [0], [0]>} : vector<8x1x16xf32>, vector<8x16x128xf32>, vector<8x1x128xf32> -> vector<8x1x128xf32>
    %18 = vector.shape_cast %17 : vector<8x1x128xf32> to vector<8x128xf32>
    %c0_9 = arith.constant 0 : index
    %c0_10 = arith.constant 0 : index
    %19 = vector.load %arg3[%c0_9, %c0_10] : memref<8x128xf32, #tpu.memory_space<vmem>>, vector<8x128xf32>
    tpu.vector_store %arg3[%c0_9, %c0_10], %18 {strides = array<i32>} : memref<8x128xf32, #tpu.memory_space<vmem>>, vector<8x128xf32>,
    return
  }
  func.func @transform_0(%arg0: i32) -> (i32, i32, i32) {
    %c0_i32 = arith.constant 0 : i32
    %c0_i32_0 = arith.constant 0 : i32
    %c0_i32_1 = arith.constant 0 : i32
    return %arg0, %c0_i32, %c0_i32_0 : i32, i32, i32
  }
  func.func @transform_1(%arg0: i32) -> (i32, i32) {
    %c0_i32 = arith.constant 0 : i32
    %c0_i32_0 = arith.constant 0 : i32
    %c0_i32_1 = arith.constant 0 : i32
    return %c0_i32, %c0_i32_0 : i32, i32
  }
  func.func @transform_2(%arg0: i32) -> (i32, i32) {
    %c0_i32 = arith.constant 0 : i32
    %c0_i32_0 = arith.constant 0 : i32
    return %arg0, %c0_i32 : i32, i32
  }
  func.func @transform_3(%arg0: i32) -> (i32, i32) {
    %c0_i32 = arith.constant 0 : i32
    %c0_i32_0 = arith.constant 0 : i32
    return %arg0, %c0_i32 : i32, i32
  }
}

</mosaic_0001>

<llo_original>
// kernel: tpu_custom_call.1
$region0: #{tpu_custom_call.1}
  #allocation0 [shape = 'u32[]', space=smem, size = 0x4, offset = 0x4, fixed_abs, tag = 'smem constant byte address 0x4 - core index']
  #allocation1 [shape = 'u32[72,128]{1,0:T(1,128)}', space=vmem, size = 0x9000, scoped, tag = 'internal scratch']
  %s0 = inlined_call_operand.hbm [shape: f32[16,16,128], index: 0, kind: input, shape index: {}]
  %s1 = inlined_call_operand.hbm [shape: f32[1,128], index: 1, kind: input, shape index: {}]
  %s2 = inlined_call_operand.hbm [shape: f32[16,128], index: 2, kind: output, shape index: {0}]
  %s3 = inlined_call_operand.hbm [shape: f32[16,16], index: 3, kind: output, shape index: {1}]
  %4 = xla_tuple %s2, %s3
  %s5 = sld [smem:[#allocation0]]
  $region57: #{tpu_custom_call.1} parent=0
    _
  %s7 = ssub.s32 1, %s5
  %s8 = scalar_select 0, %s7, %s5
  $region1: #{tpu_custom_call.1} parent=0
    #allocation2 [shape = 'u8[131072]{0}', space=vmem, size = 0x20000, scoped, tag = 'input window, operand 0']
    #allocation3 [shape = 's32[2]{0}', space=sflag, size = 0x8, scoped, tag = 'scoped memory for tpu_custom_call.1']
    #allocation4 [shape = 's32[2]{0}', space=sflag, size = 0x8, scoped, tag = 'scoped memory for tpu_custom_call.1']
    #allocation5 [shape = 'u8[512]{0}', space=vmem, size = 0x400, scoped, tag = 'input window, operand 1, single buffered']
    #allocation6 [shape = 's32[1]{0}', space=sflag, size = 0x4, scoped, tag = 'scoped memory for tpu_custom_call.1']
    #allocation7 [shape = 'u8[8192]{0}', space=vmem, size = 0x2000, scoped, tag = 'output window, operand 0']
    #allocation8 [shape = 'u8[8192]{0}', space=vmem, size = 0x2000, scoped, tag = 'output window, operand 1']
    #allocation9 [shape = 's32[2]{0}', space=sflag, size = 0x8, scoped, tag = 'scoped memory for tpu_custom_call.1']
    %9 = vsyncpa [#allocation3], 0
    %s10 = scalar_lea.sflag [#allocation3], 1
    %11 = vsyncpa %s10, 0
    %12 = vsyncpa [#allocation6], 0
    %13 = vsyncpa [#allocation4], 0
    %s14 = scalar_lea.sflag [#allocation4], 1
    %15 = vsyncpa %s14, 0
    %16 = vsyncpa [#allocation9], 0
    %s17 = scalar_lea.sflag [#allocation9], 1
    %18 = vsyncpa %s17, 0
    loop: start=0, step=1, limit=4
    $region2: #{tpu_custom_call.1} parent=1 // loop_pre_header
      _
    $region3: #{tpu_custom_call.1} parent=1 // loop_header
      %s20 = sphi 0, %s24
      %p21 = scmp.ge.s32.totalorder %s20, 4
      %s30 = sphi 0, %s32
      %s33 = sphi 0, %s30
      %s34 = sphi 0, %s33
      %s50 = sphi 0, %s34
      %s54 = sphi 0, %s54
      %s56 = sphi 0, %s54
      %s57 = sphi 0, %s56
      %s71 = sphi 0, %s57
      %s77 = sphi 0, %s79
      %s80 = sphi 0, %s77
      %s81 = sphi 0, %s80
      %s97 = sphi 0, %s81
      %s103 = sphi 0, %s105
      %s106 = sphi 0, %s103
      %s107 = sphi 0, %s106
      %s123 = sphi 0, %s107
    $region4: #{tpu_custom_call.1} parent=1 // loop_header_branch
      %23 = sbr.rel (%p21) target = $region8
    $region5: #{tpu_custom_call.1} parent=1 // loop_body
      %s25 = ssub.s32 %s20, 1
      %s26 = ssub.s32 %s20, 2
      %s27 = sadd.s32 %s20, 1
      %s28 = ssub.s32 %s20, %s27
      %p29 = scmp.eq.s32.totalorder %s28, 0
      %s31 = sadd.s32 %s30, 1
      %s32 = scalar_select %p29, %s30, %s31
      %p35 = pneg %p29
      %p36 = scmp.eq.s32.totalorder %s20, 1
      %p37 = por %p35, %p36
      %p38 = scmp.ne.s32.totalorder %s30, %s33
      %p39 = scmp.eq.s32.totalorder %s20, 0
      %p40 = por %p38, %p39
      %p41 = scmp.ne.s32.totalorder %s30, %s33
      %p42 = scmp.eq.s32.totalorder %s25, 1
      %p43 = por %p41, %p42
      %p44 = scmp.ne.s32.totalorder %s33, %s34
      %p45 = scmp.eq.s32.totalorder %s25, 0
      %p46 = por %p44, %p45
      %p47 = scmp.ne.s32.totalorder %s33, %s34
      %p48 = scmp.eq.s32.totalorder %s26, 1
      %p49 = por %p47, %p48
      %p51 = scmp.ne.s32.totalorder %s34, %s50
      %p52 = scmp.eq.s32.totalorder %s26, 0
      %p53 = por %p51, %p52
      %s55 = sadd.s32 %s54, 1
      %p58 = scmp.eq.s32.totalorder %s20, 1
      %p59 = scmp.ne.s32.totalorder %s54, %s56
      %p60 = scmp.eq.s32.totalorder %s20, 0
      %p61 = por %p59, %p60
      %p62 = scmp.ne.s32.totalorder %s54, %s56
      %p63 = scmp.eq.s32.totalorder %s25, 1
      %p64 = por %p62, %p63
      %p65 = scmp.ne.s32.totalorder %s56, %s57
      %p66 = scmp.eq.s32.totalorder %s25, 0
      %p67 = por %p65, %p66
      %p68 = scmp.ne.s32.totalorder %s56, %s57
      %p69 = scmp.eq.s32.totalorder %s26, 1
      %p70 = por %p68, %p69
      %p72 = scmp.ne.s32.totalorder %s57, %s71
      %p73 = scmp.eq.s32.totalorder %s26, 0
      %p74 = por %p72, %p73
      %s75 = ssub.s32 %s20, %s27
      %p76 = scmp.eq.s32.totalorder %s75, 0
      %s78 = sadd.s32 %s77, 1
      %s79 = scalar_select %p76, %s77, %s78
      %p82 = pneg %p76
      %p83 = scmp.eq.s32.totalorder %s20, 1
      %p84 = por %p82, %p83
      %p85 = scmp.ne.s32.totalorder %s77, %s80
      %p86 = scmp.eq.s32.totalorder %s20, 0
      %p87 = por %p85, %p86
      %p88 = scmp.ne.s32.totalorder %s77, %s80
      %p89 = scmp.eq.s32.totalorder %s25, 1
      %p90 = por %p88, %p89
      %p91 = scmp.ne.s32.totalorder %s80, %s81
      %p92 = scmp.eq.s32.totalorder %s25, 0
      %p93 = por %p91, %p92
      %p94 = scmp.ne.s32.totalorder %s80, %s81
      %p95 = scmp.eq.s32.totalorder %s26, 1
      %p96 = por %p94, %p95
      %p98 = scmp.ne.s32.totalorder %s81, %s97
      %p99 = scmp.eq.s32.totalorder %s26, 0
      %p100 = por %p98, %p99
      %s101 = ssub.s32 %s20, %s27
      %p102 = scmp.eq.s32.totalorder %s101, 0
      %s104 = sadd.s32 %s103, 1
      %s105 = scalar_select %p102, %s103, %s104
      %p108 = pneg %p102
      %p109 = scmp.eq.s32.totalorder %s20, 1
      %p110 = por %p108, %p109
      %p111 = scmp.ne.s32.totalorder %s103, %s106
      %p112 = scmp.eq.s32.totalorder %s20, 0
      %p113 = por %p111, %p112
      %p114 = scmp.ne.s32.totalorder %s103, %s106
      %p115 = scmp.eq.s32.totalorder %s25, 1
      %p116 = por %p114, %p115
      %p117 = scmp.ne.s32.totalorder %s106, %s107
      %p118 = scmp.eq.s32.totalorder %s25, 0
      %p119 = por %p117, %p118
      %p120 = scmp.ne.s32.totalorder %s106, %s107
      %p121 = scmp.eq.s32.totalorder %s26, 1
      %p122 = por %p120, %p121
      %p124 = scmp.ne.s32.totalorder %s107, %s123
      %p125 = scmp.eq.s32.totalorder %s26, 0
      %p126 = por %p124, %p125
      %p127 = scmp.le.s32.totalorder 1, %s20
      %p128 = scmp.lt.s32.totalorder %s20, 3
      %p129 = pnand %p127, %p128
      %p130 = pneg %p129
      // Predicated region
      $region9: #{tpu_custom_call.1} parent=5 // pred_check
        _
      $region10: #{tpu_custom_call.1} parent=5 // pred_check_branch
        %132 = sbr.rel (%p129) target = $region12
      $region11: #{tpu_custom_call.1} parent=5 // pred_region
        %s133 = ssub.s32 %s20, 1
        // Predicated region
        $region13: #{tpu_custom_call.1} parent=11 // pred_check
          %p134 = pneg %p67
        $region14: #{tpu_custom_call.1} parent=11 // pred_check_branch
          %136 = sbr.rel (%p134) target = $region16
        $region15: #{tpu_custom_call.1} parent=11 // pred_region
          %138 = vsyncadd [#allocation6], 0
          %s140 = sshll.u32 %s1, 4
          %s141 = int_to_ptr.hbm [resolvable:$true] %s140
          %s142 = sshll.u32 [#allocation5], 4
          %s143 = int_to_ptr.vmem [resolvable:$true] %s142
          %145 = dma.hbm_to_vmem [thread:$0]  %s141, 16, %s143, [#allocation6]
        $region16: #{tpu_custom_call.1} parent=11 // pred_fallthru
          _
      $region12: #{tpu_custom_call.1} parent=5 // pred_fallthru
        _
      %p146 = scmp.lt.s32.totalorder %s20, 2
      // Predicated region
      $region17: #{tpu_custom_call.1} parent=5 // pred_check
        %p147 = pneg %p146
      $region18: #{tpu_custom_call.1} parent=5 // pred_check_branch
        %149 = sbr.rel (%p147) target = $region20
      $region19: #{tpu_custom_call.1} parent=5 // pred_region
        // Predicated region
        $region21: #{tpu_custom_call.1} parent=19 // pred_check
          %p150 = pneg %p40
        $region22: #{tpu_custom_call.1} parent=19 // pred_check_branch
          %152 = sbr.rel (%p150) target = $region24
        $region23: #{tpu_custom_call.1} parent=19 // pred_region
          %s153 = sand.u32 %s30, 1
          %s154 = scalar_lea.sflag [#allocation3], %s153
          %s155 = sand.u32 %s30, 1
          %s156 = smul.addr %s155, 128
          %s157 = scalar_lea.vmem [#allocation2], %s156
          %s158 = smul.u32 8, %s20
          %160 = vsyncadd %s154, 0
          %s161 = smul.addr %s158, 2
          %s162 = smul.addr %s161, 8
          %s163 = scalar_lea.hbm %s0, %s162
          %s164 = sshll.u32 %s163, 4
          %s165 = int_to_ptr.hbm [resolvable:$true] %s164
          %s166 = sshll.u32 %s157, 4
          %s167 = int_to_ptr.vmem [resolvable:$true] %s166
          %172 = dma.hbm_to_vmem [thread:$0]  %s165, 2048, %s167, %s154, 128, 128, 8
        $region24: #{tpu_custom_call.1} parent=19 // pred_fallthru
          _
      $region20: #{tpu_custom_call.1} parent=5 // pred_fallthru
        _
      %p173 = scmp.le.s32.totalorder 1, %s20
      %p174 = scmp.lt.s32.totalorder %s20, 3
      %p175 = pnand %p173, %p174
      %p176 = pneg %p175
      // Predicated region
      $region25: #{tpu_custom_call.1} parent=5 // pred_check
        _
      $region26: #{tpu_custom_call.1} parent=5 // pred_check_branch
        %178 = sbr.rel (%p175) target = $region28
      $region27: #{tpu_custom_call.1} parent=5 // pred_region
        %s179 = ssub.s32 %s20, 1
        %s180 = sand.u32 %s33, 1
        %s181 = scalar_lea.sflag [#allocation3], %s180
        %s182 = sand.u32 %s33, 1
        %s183 = smul.addr %s182, 128
        %s184 = scalar_lea.vmem [#allocation2], %s183
        // Predicated region
        $region29: #{tpu_custom_call.1} parent=27 // pred_check
          %p185 = pneg %p46
        $region30: #{tpu_custom_call.1} parent=27 // pred_check_branch
          %187 = sbr.rel (%p185) target = $region32
        $region31: #{tpu_custom_call.1} parent=27 // pred_region
          %189 = dma.done %s181, 2048
        $region32: #{tpu_custom_call.1} parent=27 // pred_fallthru
          _
        // Predicated region
        $region33: #{tpu_custom_call.1} parent=27 // pred_check
          %p190 = pneg %p67
        $region34: #{tpu_custom_call.1} parent=27 // pred_check_branch
          %192 = sbr.rel (%p190) target = $region36
        $region35: #{tpu_custom_call.1} parent=27 // pred_region
          %194 = dma.done [#allocation6], 16
        $region36: #{tpu_custom_call.1} parent=27 // pred_fallthru
          _
        %s195 = sand.u32 %s33, 1
        %s196 = scalar_lea.sflag [#allocation3], %s195
        %s197 = sand.u32 %s33, 1
        %s198 = smul.addr %s197, 128
        %s199 = scalar_lea.vmem [#allocation2], %s198
        %p200 = pneg %p46
        %p201 = pneg %p43
        %p202 = pneg %p67
        %p203 = pneg %p64
        %p204 = pneg %p93
        %p205 = pneg %p90
        %s206 = sand.u32 %s80, 1
        %s207 = scalar_lea.sflag [#allocation4], %s206
        %s208 = sand.u32 %s80, 1
        %s209 = smul.addr %s208, 8
        %s210 = scalar_lea.vmem [#allocation7], %s209
        %p211 = pneg %p119
        %p212 = pneg %p116
        %s213 = sand.u32 %s106, 1
        %s214 = scalar_lea.sflag [#allocation9], %s213
        %s215 = sand.u32 %s106, 1
        %s216 = smul.addr %s215, 8
        %s217 = scalar_lea.vmem [#allocation8], %s216
        %s218 = smul.u32 8, %s25
        %v219 = vld [vmem:[%s184] sm:$0xff]
        %v220 = vld [vmem:[%s184 + $0x8] sm:$0xff]
        %v221 = vld [vmem:[%s184 + $0x10] sm:$0xff]
        %v222 = vld [vmem:[%s184 + $0x18] sm:$0xff]
        %v223 = vld [vmem:[%s184 + $0x20] sm:$0xff]
        %v224 = vld [vmem:[%s184 + $0x28] sm:$0xff]
        %v225 = vld [vmem:[%s184 + $0x30] sm:$0xff]
        %v226 = vld [vmem:[%s184 + $0x38] sm:$0xff]
        %v227 = vld [vmem:[%s184 + $0x40] sm:$0xff]
        %v228 = vld [vmem:[%s184 + $0x48] sm:$0xff]
        %v229 = vld [vmem:[%s184 + $0x50] sm:$0xff]
        %v230 = vld [vmem:[%s184 + $0x58] sm:$0xff]
        %v231 = vld [vmem:[%s184 + $0x60] sm:$0xff]
        %v232 = vld [vmem:[%s184 + $0x68] sm:$0xff]
        %v233 = vld [vmem:[%s184 + $0x70] sm:$0xff]
        %v234 = vld [vmem:[%s184 + $0x78] sm:$0xff]
        %v235 = vld [vmem:[#allocation5] sm:$0x1]
        %v237 = vperm.slane %v235, 0
        %v239 = vmul.f32 %v219, %v237
        %v240 = vmul.f32 %v220, %v237
        %v241 = vmul.f32 %v221, %v237
        %v242 = vmul.f32 %v222, %v237
        %v243 = vmul.f32 %v223, %v237
        %v244 = vmul.f32 %v224, %v237
        %v245 = vmul.f32 %v225, %v237
        %v246 = vmul.f32 %v226, %v237
        %v247 = vmul.f32 %v227, %v237
        %v248 = vmul.f32 %v228, %v237
        %v249 = vmul.f32 %v229, %v237
        %v250 = vmul.f32 %v230, %v237
        %v251 = vmul.f32 %v231, %v237
        %v252 = vmul.f32 %v232, %v237
        %v253 = vmul.f32 %v233, %v237
        %v254 = vmul.f32 %v234, %v237
        %255 = vadd.xlane.f32.xlu0 %v239
        %v256 = vpop.xlane.xlu0 %255
        %257 = vadd.xlane.f32.xlu0 %v240
        %v258 = vpop.xlane.xlu0 %257
        %259 = vadd.xlane.f32.xlu0 %v241
        %v260 = vpop.xlane.xlu0 %259
        %261 = vadd.xlane.f32.xlu0 %v242
        %v262 = vpop.xlane.xlu0 %261
        %263 = vadd.xlane.f32.xlu0 %v243
        %v264 = vpop.xlane.xlu0 %263
        %265 = vadd.xlane.f32.xlu0 %v244
        %v266 = vpop.xlane.xlu0 %265
        %267 = vadd.xlane.f32.xlu0 %v245
        %v268 = vpop.xlane.xlu0 %267
        %269 = vadd.xlane.f32.xlu0 %v246
        %v270 = vpop.xlane.xlu0 %269
        %271 = vadd.xlane.f32.xlu0 %v247
        %v272 = vpop.xlane.xlu0 %271
        %273 = vadd.xlane.f32.xlu0 %v248
        %v274 = vpop.xlane.xlu0 %273
        %275 = vadd.xlane.f32.xlu0 %v249
        %v276 = vpop.xlane.xlu0 %275
        %277 = vadd.xlane.f32.xlu0 %v250
        %v278 = vpop.xlane.xlu0 %277
        %279 = vadd.xlane.f32.xlu0 %v251
        %v280 = vpop.xlane.xlu0 %279
        %281 = vadd.xlane.f32.xlu0 %v252
        %v282 = vpop.xlane.xlu0 %281
        %283 = vadd.xlane.f32.xlu0 %v253
        %v284 = vpop.xlane.xlu0 %283
        %285 = vadd.xlane.f32.xlu0 %v254
        %v286 = vpop.xlane.xlu0 %285
        %v303 = vlaneseq
        %v304 = vand.u32 %v303, 127
        %v305 = vperm.slane %v256, %v304
        %v306 = vadd.s32 %v304, 4294967288
        %v307 = vperm.slane %v258, %v306
        %vm308 = vcmask 130112
        %v309 = vsel %vm308, %v307, %v305
        %v310 = vperm.slane %v260, %v304
        %v311 = vperm.slane %v262, %v306
        %v312 = vsel %vm308, %v311, %v310
        %v313 = vperm.slane %v264, %v304
        %v314 = vperm.slane %v266, %v306
        %v315 = vsel %vm308, %v314, %v313
        %v316 = vperm.slane %v268, %v304
        %v317 = vperm.slane %v270, %v306
        %v318 = vsel %vm308, %v317, %v316
        %v319 = vperm.slane %v272, %v304
        %v320 = vperm.slane %v274, %v306
        %v321 = vsel %vm308, %v320, %v319
        %v322 = vperm.slane %v276, %v304
        %v323 = vperm.slane %v278, %v306
        %v324 = vsel %vm308, %v323, %v322
        %v325 = vperm.slane %v280, %v304
        %v326 = vperm.slane %v282, %v306
        %v327 = vsel %vm308, %v326, %v325
        %v328 = vperm.slane %v284, %v304
        %v329 = vperm.slane %v286, %v306
        %v330 = vsel %vm308, %v329, %v328
        %vm331 = vcmask 1041409
        %v332 = vsel %vm331, %v312, %v309
        %vm333 = vcmask 1042434
        %v334 = vsel %vm333, %v315, %v332
        %vm335 = vcmask 1043459
        %v336 = vsel %vm335, %v318, %v334
        %vm337 = vcmask 1044484
        %v338 = vsel %vm337, %v321, %v336
        %vm339 = vcmask 1045509
        %v340 = vsel %vm339, %v324, %v338
        %vm341 = vcmask 1046534
        %v342 = vsel %vm341, %v327, %v340
        %vm343 = vcmask 1047559
        %v344 = vsel %vm343, %v330, %v342
        %vm346 = vcmask 130048
        %v347 = vsel %vm346, %v344, -inf
        %348 = vmax.xlane.f32.xlu0 %v347
        %v349 = vpop.xlane.xlu0 %348
        %v351 = vperm.slane %v349, 0
        %v352 = vperm.slane %v349, 1
        %v353 = vperm.slane %v349, 2
        %v354 = vperm.slane %v349, 3
        %v355 = vperm.slane %v349, 4
        %v356 = vperm.slane %v349, 5
        %v357 = vperm.slane %v349, 6
        %v358 = vperm.slane %v349, 7
        %v367 = vsub.f32 %v256, %v351
        %v368 = vsub.f32 %v258, %v351
        %v369 = vsub.f32 %v260, %v352
        %v370 = vsub.f32 %v262, %v352
        %v371 = vsub.f32 %v264, %v353
        %v372 = vsub.f32 %v266, %v353
        %v373 = vsub.f32 %v268, %v354
        %v374 = vsub.f32 %v270, %v354
        %v375 = vsub.f32 %v272, %v355
        %v376 = vsub.f32 %v274, %v355
        %v377 = vsub.f32 %v276, %v356
        %v378 = vsub.f32 %v278, %v356
        %v379 = vsub.f32 %v280, %v357
        %v380 = vsub.f32 %v282, %v357
        %v381 = vsub.f32 %v284, %v358
        %v382 = vsub.f32 %v286, %v358
        %v383 = vmul.f32 %v367, 1.442695
        %v384 = vpow.pop %v383
        %v385 = vmul.f32 %v368, 1.442695
        %v386 = vpow.pop %v385
        %v387 = vmul.f32 %v369, 1.442695
        %v388 = vpow.pop %v387
        %v389 = vmul.f32 %v370, 1.442695
        %v390 = vpow.pop %v389
        %v391 = vmul.f32 %v371, 1.442695
        %v392 = vpow.pop %v391
        %v393 = vmul.f32 %v372, 1.442695
        %v394 = vpow.pop %v393
        %v395 = vmul.f32 %v373, 1.442695
        %v396 = vpow.pop %v395
        %v397 = vmul.f32 %v374, 1.442695
        %v398 = vpow.pop %v397
        %v399 = vmul.f32 %v375, 1.442695
        %v400 = vpow.pop %v399
        %v401 = vmul.f32 %v376, 1.442695
        %v402 = vpow.pop %v401
        %v403 = vmul.f32 %v377, 1.442695
        %v404 = vpow.pop %v403
        %v405 = vmul.f32 %v378, 1.442695
        %v406 = vpow.pop %v405
        %v407 = vmul.f32 %v379, 1.442695
        %v408 = vpow.pop %v407
        %v409 = vmul.f32 %v380, 1.442695
        %v410 = vpow.pop %v409
        %v411 = vmul.f32 %v381, 1.442695
        %v412 = vpow.pop %v411
        %v413 = vmul.f32 %v382, 1.442695
        %v414 = vpow.pop %v413
        %431 = vset.pattern.permute.xlu0 0
        %432 = vperm.xlu0 %431, %v384
        %v433 = vpop.permute.xlu0 %432
        %434 = vset.pattern.permute.xlu0 0
        %435 = vperm.xlu0 %434, %v386
        %v436 = vpop.permute.xlu0 %435
        %437 = vset.pattern.permute.xlu0 0
        %438 = vperm.xlu0 %437, %v388
        %v439 = vpop.permute.xlu0 %438
        %440 = vset.pattern.permute.xlu0 0
        %441 = vperm.xlu0 %440, %v390
        %v442 = vpop.permute.xlu0 %441
        %443 = vset.pattern.permute.xlu0 0
        %444 = vperm.xlu0 %443, %v392
        %v445 = vpop.permute.xlu0 %444
        %446 = vset.pattern.permute.xlu0 0
        %447 = vperm.xlu0 %446, %v394
        %v448 = vpop.permute.xlu0 %447
        %449 = vset.pattern.permute.xlu0 0
        %450 = vperm.xlu0 %449, %v396
        %v451 = vpop.permute.xlu0 %450
        %452 = vset.pattern.permute.xlu0 0
        %453 = vperm.xlu0 %452, %v398
        %v454 = vpop.permute.xlu0 %453
        %455 = vset.pattern.permute.xlu0 0
        %456 = vperm.xlu0 %455, %v400
        %v457 = vpop.permute.xlu0 %456
        %458 = vset.pattern.permute.xlu0 0
        %459 = vperm.xlu0 %458, %v402
        %v460 = vpop.permute.xlu0 %459
        %461 = vset.pattern.permute.xlu0 0
        %462 = vperm.xlu0 %461, %v404
        %v463 = vpop.permute.xlu0 %462
        %464 = vset.pattern.permute.xlu0 0
        %465 = vperm.xlu0 %464, %v406
        %v466 = vpop.permute.xlu0 %465
        %467 = vset.pattern.permute.xlu0 0
        %468 = vperm.xlu0 %467, %v408
        %v469 = vpop.permute.xlu0 %468
        %470 = vset.pattern.permute.xlu0 0
        %471 = vperm.xlu0 %470, %v410
        %v472 = vpop.permute.xlu0 %471
        %473 = vset.pattern.permute.xlu0 0
        %474 = vperm.xlu0 %473, %v412
        %v475 = vpop.permute.xlu0 %474
        %476 = vset.pattern.permute.xlu0 0
        %477 = vperm.xlu0 %476, %v414
        %v478 = vpop.permute.xlu0 %477
        %v479 = vperm.slane %v433, %v304
        %v480 = vperm.slane %v436, %v306
        %v481 = vsel %vm308, %v480, %v479
        %v482 = vperm.slane %v439, %v304
        %v483 = vperm.slane %v442, %v306
        %v484 = vsel %vm308, %v483, %v482
        %v485 = vperm.slane %v445, %v304
        %v486 = vperm.slane %v448, %v306
        %v487 = vsel %vm308, %v486, %v485
        %v488 = vperm.slane %v451, %v304
        %v489 = vperm.slane %v454, %v306
        %v490 = vsel %vm308, %v489, %v488
        %v491 = vperm.slane %v457, %v304
        %v492 = vperm.slane %v460, %v306
        %v493 = vsel %vm308, %v492, %v491
        %v494 = vperm.slane %v463, %v304
        %v495 = vperm.slane %v466, %v306
        %v496 = vsel %vm308, %v495, %v494
        %v497 = vperm.slane %v469, %v304
        %v498 = vperm.slane %v472, %v306
        %v499 = vsel %vm308, %v498, %v497
        %v500 = vperm.slane %v475, %v304
        %v501 = vperm.slane %v478, %v306
        %v502 = vsel %vm308, %v501, %v500
        %v503 = vsel %vm331, %v484, %v481
        %v504 = vsel %vm333, %v487, %v503
        %v505 = vsel %vm335, %v490, %v504
        %v506 = vsel %vm337, %v493, %v505
        %v507 = vsel %vm339, %v496, %v506
        %v508 = vsel %vm341, %v499, %v507
        %v509 = vsel %vm343, %v502, %v508
        %v511 = vsel %vm346, %v509, 0.0
        %512 = vadd.xlane.f32.xlu0 %v511
        %v513 = vpop.xlane.xlu0 %512
        %v515 = vperm.slane %v513, 0
        %v516 = vperm.slane %v513, 1
        %v517 = vperm.slane %v513, 2
        %v518 = vperm.slane %v513, 3
        %v519 = vperm.slane %v513, 4
        %v520 = vperm.slane %v513, 5
        %v521 = vperm.slane %v513, 6
        %v522 = vperm.slane %v513, 7
        %v531 = vrcp.pop %v515
        %v532 = vmul.f32 %v515, %v531
        %v533 = vsub.f32 1.0, %v532
        %v534 = vmul.f32 %v531, %v533
        %v535 = vadd.f32 %v531, %v534
        %vm536 = vweird.f32 %v515
        %vm537 = vweird.f32 %v531
        %vm538 = vmor %vm536, %vm537
        %v539 = vsel %vm538, %v531, %v535
        %v540 = vand.u32 2147483647, %v515
        %vm541 = vcmp.eq.f32.partialorder %v540, 8.507059e+37
        %v542 = vand.u32 %v515, 2147483648
        %v543 = vor.u32 1.1754944e-38, %v542
        %v544 = vsel %vm541, %v543, %v539
        %v545 = vmul.f32 %v384, %v544
        %v546 = vmul.f32 %v386, %v544
        %v547 = vrcp.pop %v516
        %v548 = vmul.f32 %v516, %v547
        %v549 = vsub.f32 1.0, %v548
        %v550 = vmul.f32 %v547, %v549
        %v551 = vadd.f32 %v547, %v550
        %vm552 = vweird.f32 %v516
        %vm553 = vweird.f32 %v547
        %vm554 = vmor %vm552, %vm553
        %v555 = vsel %vm554, %v547, %v551
        %v556 = vand.u32 2147483647, %v516
        %vm557 = vcmp.eq.f32.partialorder %v556, 8.507059e+37
        %v558 = vand.u32 %v516, 2147483648
        %v559 = vor.u32 1.1754944e-38, %v558
        %v560 = vsel %vm557, %v559, %v555
        %v561 = vmul.f32 %v388, %v560
        %v562 = vmul.f32 %v390, %v560
        %v563 = vrcp.pop %v517
        %v564 = vmul.f32 %v517, %v563
        %v565 = vsub.f32 1.0, %v564
        %v566 = vmul.f32 %v563, %v565
        %v567 = vadd.f32 %v563, %v566
        %vm568 = vweird.f32 %v517
        %vm569 = vweird.f32 %v563
        %vm570 = vmor %vm568, %vm569
        %v571 = vsel %vm570, %v563, %v567
        %v572 = vand.u32 2147483647, %v517
        %vm573 = vcmp.eq.f32.partialorder %v572, 8.507059e+37
        %v574 = vand.u32 %v517, 2147483648
        %v575 = vor.u32 1.1754944e-38, %v574
        %v576 = vsel %vm573, %v575, %v571
        %v577 = vmul.f32 %v392, %v576
        %v578 = vmul.f32 %v394, %v576
        %v579 = vrcp.pop %v518
        %v580 = vmul.f32 %v518, %v579
        %v581 = vsub.f32 1.0, %v580
        %v582 = vmul.f32 %v579, %v581
        %v583 = vadd.f32 %v579, %v582
        %vm584 = vweird.f32 %v518
        %vm585 = vweird.f32 %v579
        %vm586 = vmor %vm584, %vm585
        %v587 = vsel %vm586, %v579, %v583
        %v588 = vand.u32 2147483647, %v518
        %vm589 = vcmp.eq.f32.partialorder %v588, 8.507059e+37
        %v590 = vand.u32 %v518, 2147483648
        %v591 = vor.u32 1.1754944e-38, %v590
        %v592 = vsel %vm589, %v591, %v587
        %v593 = vmul.f32 %v396, %v592
        %v594 = vmul.f32 %v398, %v592
        %v595 = vrcp.pop %v519
        %v596 = vmul.f32 %v519, %v595
        %v597 = vsub.f32 1.0, %v596
        %v598 = vmul.f32 %v595, %v597
        %v599 = vadd.f32 %v595, %v598
        %vm600 = vweird.f32 %v519
        %vm601 = vweird.f32 %v595
        %vm602 = vmor %vm600, %vm601
        %v603 = vsel %vm602, %v595, %v599
        %v604 = vand.u32 2147483647, %v519
        %vm605 = vcmp.eq.f32.partialorder %v604, 8.507059e+37
        %v606 = vand.u32 %v519, 2147483648
        %v607 = vor.u32 1.1754944e-38, %v606
        %v608 = vsel %vm605, %v607, %v603
        %v609 = vmul.f32 %v400, %v608
        %v610 = vmul.f32 %v402, %v608
        %v611 = vrcp.pop %v520
        %v612 = vmul.f32 %v520, %v611
        %v613 = vsub.f32 1.0, %v612
        %v614 = vmul.f32 %v611, %v613
        %v615 = vadd.f32 %v611, %v614
        %vm616 = vweird.f32 %v520
        %vm617 = vweird.f32 %v611
        %vm618 = vmor %vm616, %vm617
        %v619 = vsel %vm618, %v611, %v615
        %v620 = vand.u32 2147483647, %v520
        %vm621 = vcmp.eq.f32.partialorder %v620, 8.507059e+37
        %v622 = vand.u32 %v520, 2147483648
        %v623 = vor.u32 1.1754944e-38, %v622
        %v624 = vsel %vm621, %v623, %v619
        %v625 = vmul.f32 %v404, %v624
        %v626 = vmul.f32 %v406, %v624
        %v627 = vrcp.pop %v521
        %v628 = vmul.f32 %v521, %v627
        %v629 = vsub.f32 1.0, %v628
        %v630 = vmul.f32 %v627, %v629
        %v631 = vadd.f32 %v627, %v630
        %vm632 = vweird.f32 %v521
        %vm633 = vweird.f32 %v627
        %vm634 = vmor %vm632, %vm633
        %v635 = vsel %vm634, %v627, %v631
        %v636 = vand.u32 2147483647, %v521
        %vm637 = vcmp.eq.f32.partialorder %v636, 8.507059e+37
        %v638 = vand.u32 %v521, 2147483648
        %v639 = vor.u32 1.1754944e-38, %v638
        %v640 = vsel %vm637, %v639, %v635
        %v641 = vmul.f32 %v408, %v640
        %v642 = vmul.f32 %v410, %v640
        %v643 = vrcp.pop %v522
        %v644 = vmul.f32 %v522, %v643
        %v645 = vsub.f32 1.0, %v644
        %v646 = vmul.f32 %v643, %v645
        %v647 = vadd.f32 %v643, %v646
        %vm648 = vweird.f32 %v522
        %vm649 = vweird.f32 %v643
        %vm650 = vmor %vm648, %vm649
        %v651 = vsel %vm650, %v643, %v647
        %v652 = vand.u32 2147483647, %v522
        %vm653 = vcmp.eq.f32.partialorder %v652, 8.507059e+37
        %v654 = vand.u32 %v522, 2147483648
        %v655 = vor.u32 1.1754944e-38, %v654
        %v656 = vsel %vm653, %v655, %v651
        %v657 = vmul.f32 %v412, %v656
        %v658 = vmul.f32 %v414, %v656
        %675 = vset.pattern.permute.xlu0 0
        %676 = vperm.xlu0 %675, %v545
        %v677 = vpop.permute.xlu0 %676
        %678 = vset.pattern.permute.xlu0 0
        %679 = vperm.xlu0 %678, %v546
        %v680 = vpop.permute.xlu0 %679
        %681 = vset.pattern.permute.xlu0 0
        %682 = vperm.xlu0 %681, %v561
        %v683 = vpop.permute.xlu0 %682
        %684 = vset.pattern.permute.xlu0 0
        %685 = vperm.xlu0 %684, %v562
        %v686 = vpop.permute.xlu0 %685
        %687 = vset.pattern.permute.xlu0 0
        %688 = vperm.xlu0 %687, %v577
        %v689 = vpop.permute.xlu0 %688
        %690 = vset.pattern.permute.xlu0 0
        %691 = vperm.xlu0 %690, %v578
        %v692 = vpop.permute.xlu0 %691
        %693 = vset.pattern.permute.xlu0 0
        %694 = vperm.xlu0 %693, %v593
        %v695 = vpop.permute.xlu0 %694
        %696 = vset.pattern.permute.xlu0 0
        %697 = vperm.xlu0 %696, %v594
        %v698 = vpop.permute.xlu0 %697
        %699 = vset.pattern.permute.xlu0 0
        %700 = vperm.xlu0 %699, %v609
        %v701 = vpop.permute.xlu0 %700
        %702 = vset.pattern.permute.xlu0 0
        %703 = vperm.xlu0 %702, %v610
        %v704 = vpop.permute.xlu0 %703
        %705 = vset.pattern.permute.xlu0 0
        %706 = vperm.xlu0 %705, %v625
        %v707 = vpop.permute.xlu0 %706
        %708 = vset.pattern.permute.xlu0 0
        %709 = vperm.xlu0 %708, %v626
        %v710 = vpop.permute.xlu0 %709
        %711 = vset.pattern.permute.xlu0 0
        %712 = vperm.xlu0 %711, %v641
        %v713 = vpop.permute.xlu0 %712
        %714 = vset.pattern.permute.xlu0 0
        %715 = vperm.xlu0 %714, %v642
        %v716 = vpop.permute.xlu0 %715
        %717 = vset.pattern.permute.xlu0 0
        %718 = vperm.xlu0 %717, %v657
        %v719 = vpop.permute.xlu0 %718
        %720 = vset.pattern.permute.xlu0 0
        %721 = vperm.xlu0 %720, %v658
        %v722 = vpop.permute.xlu0 %721
        %v723 = vperm.slane %v677, %v304
        %v724 = vperm.slane %v680, %v306
        %v725 = vsel %vm308, %v724, %v723
        %v726 = vperm.slane %v683, %v304
        %v727 = vperm.slane %v686, %v306
        %v728 = vsel %vm308, %v727, %v726
        %v729 = vperm.slane %v689, %v304
        %v730 = vperm.slane %v692, %v306
        %v731 = vsel %vm308, %v730, %v729
        %v732 = vperm.slane %v695, %v304
        %v733 = vperm.slane %v698, %v306
        %v734 = vsel %vm308, %v733, %v732
        %v735 = vperm.slane %v701, %v304
        %v736 = vperm.slane %v704, %v306
        %v737 = vsel %vm308, %v736, %v735
        %v738 = vperm.slane %v707, %v304
        %v739 = vperm.slane %v710, %v306
        %v740 = vsel %vm308, %v739, %v738
        %v741 = vperm.slane %v713, %v304
        %v742 = vperm.slane %v716, %v306
        %v743 = vsel %vm308, %v742, %v741
        %v744 = vperm.slane %v719, %v304
        %v745 = vperm.slane %v722, %v306
        %v746 = vsel %vm308, %v745, %v744
        %v747 = vsel %vm331, %v728, %v725
        %v748 = vsel %vm333, %v731, %v747
        %v749 = vsel %vm335, %v734, %v748
        %v750 = vsel %vm337, %v737, %v749
        %v751 = vsel %vm339, %v740, %v750
        %v752 = vsel %vm341, %v743, %v751
        %v753 = vsel %vm343, %v746, %v752
        %755 = vst.msk [vmem:[%s217] sm:$0xff] %vm346, %v753
        %v756 = vsel %vm346, %v725, 0
        %758 = vmatpush.msra.mxu0 0.0
        %759 = vmatpush.msra.mxu0 0.0
        %760 = vmatpush.msra.mxu0 0.0
        %761 = vmatpush.msra.mxu0 0.0
        %762 = vmatpush.msra.mxu0 0.0
        %763 = vmatpush.msra.mxu0 0.0
        %764 = vmatpush.msra.mxu0 0.0
        %765 = vmatpush.msra.mxu0 0.0
        %766 = vmatpush.msra.mxu0 0.0
        %767 = vmatpush.msra.mxu0 0.0
        %768 = vmatpush.msra.mxu0 0.0
        %769 = vmatpush.msra.mxu0 0.0
        %770 = vmatpush.msra.mxu0 0.0
        %771 = vmatpush.msra.mxu0 0.0
        %772 = vmatpush.msra.mxu0 %v220
        %773 = vmatpush.msra.mxu0 %v219
        %774 = vmatmul.f32.gmra.mxu0 %v756
        %v775 = vpop.f32.mrf.mxu0
        %v776 = vadd.f32 0.0, %v775
        %777 = vdwg.mxu0
        %v778 = vsel %vm346, %v728, 0
        %780 = vmatpush.msra.mxu0 0.0
        %781 = vmatpush.msra.mxu0 0.0
        %782 = vmatpush.msra.mxu0 0.0
        %783 = vmatpush.msra.mxu0 0.0
        %784 = vmatpush.msra.mxu0 0.0
        %785 = vmatpush.msra.mxu0 0.0
        %786 = vmatpush.msra.mxu0 0.0
        %787 = vmatpush.msra.mxu0 0.0
        %788 = vmatpush.msra.mxu0 0.0
        %789 = vmatpush.msra.mxu0 0.0
        %790 = vmatpush.msra.mxu0 0.0
        %791 = vmatpush.msra.mxu0 0.0
        %792 = vmatpush.msra.mxu0 0.0
        %793 = vmatpush.msra.mxu0 0.0
        %794 = vmatpush.msra.mxu0 %v222
        %795 = vmatpush.msra.mxu0 %v221
        %796 = vmatmul.f32.gmra.mxu0 %v778
        %v797 = vpop.f32.mrf.mxu0
        %v798 = vadd.f32 0.0, %v797
        %799 = vdwg.mxu0
        %v800 = vsel %vm346, %v731, 0
        %802 = vmatpush.msra.mxu0 0.0
        %803 = vmatpush.msra.mxu0 0.0
        %804 = vmatpush.msra.mxu0 0.0
        %805 = vmatpush.msra.mxu0 0.0
        %806 = vmatpush.msra.mxu0 0.0
        %807 = vmatpush.msra.mxu0 0.0
        %808 = vmatpush.msra.mxu0 0.0
        %809 = vmatpush.msra.mxu0 0.0
        %810 = vmatpush.msra.mxu0 0.0
        %811 = vmatpush.msra.mxu0 0.0
        %812 = vmatpush.msra.mxu0 0.0
        %813 = vmatpush.msra.mxu0 0.0
        %814 = vmatpush.msra.mxu0 0.0
        %815 = vmatpush.msra.mxu0 0.0
        %816 = vmatpush.msra.mxu0 %v224
        %817 = vmatpush.msra.mxu0 %v223
        %818 = vmatmul.f32.gmra.mxu0 %v800
        %v819 = vpop.f32.mrf.mxu0
        %v820 = vadd.f32 0.0, %v819
        %821 = vdwg.mxu0
        %v822 = vsel %vm346, %v734, 0
        %824 = vmatpush.msra.mxu0 0.0
        %825 = vmatpush.msra.mxu0 0.0
        %826 = vmatpush.msra.mxu0 0.0
        %827 = vmatpush.msra.mxu0 0.0
        %828 = vmatpush.msra.mxu0 0.0
        %829 = vmatpush.msra.mxu0 0.0
        %830 = vmatpush.msra.mxu0 0.0
        %831 = vmatpush.msra.mxu0 0.0
        %832 = vmatpush.msra.mxu0 0.0
        %833 = vmatpush.msra.mxu0 0.0
        %834 = vmatpush.msra.mxu0 0.0
        %835 = vmatpush.msra.mxu0 0.0
        %836 = vmatpush.msra.mxu0 0.0
        %837 = vmatpush.msra.mxu0 0.0
        %838 = vmatpush.msra.mxu0 %v226
        %839 = vmatpush.msra.mxu0 %v225
        %840 = vmatmul.f32.gmra.mxu0 %v822
        %v841 = vpop.f32.mrf.mxu0
        %v842 = vadd.f32 0.0, %v841
        %843 = vdwg.mxu0
        %v844 = vsel %vm346, %v737, 0
        %846 = vmatpush.msra.mxu0 0.0
        %847 = vmatpush.msra.mxu0 0.0
        %848 = vmatpush.msra.mxu0 0.0
        %849 = vmatpush.msra.mxu0 0.0
        %850 = vmatpush.msra.mxu0 0.0
        %851 = vmatpush.msra.mxu0 0.0
        %852 = vmatpush.msra.mxu0 0.0
        %853 = vmatpush.msra.mxu0 0.0
        %854 = vmatpush.msra.mxu0 0.0
        %855 = vmatpush.msra.mxu0 0.0
        %856 = vmatpush.msra.mxu0 0.0
        %857 = vmatpush.msra.mxu0 0.0
        %858 = vmatpush.msra.mxu0 0.0
        %859 = vmatpush.msra.mxu0 0.0
        %860 = vmatpush.msra.mxu0 %v228
        %861 = vmatpush.msra.mxu0 %v227
        %862 = vmatmul.f32.gmra.mxu0 %v844
        %v863 = vpop.f32.mrf.mxu0
        %v864 = vadd.f32 0.0, %v863
        %865 = vdwg.mxu0
        %v866 = vsel %vm346, %v740, 0
        %868 = vmatpush.msra.mxu0 0.0
        %869 = vmatpush.msra.mxu0 0.0
        %870 = vmatpush.msra.mxu0 0.0
        %871 = vmatpush.msra.mxu0 0.0
        %872 = vmatpush.msra.mxu0 0.0
        %873 = vmatpush.msra.mxu0 0.0
        %874 = vmatpush.msra.mxu0 0.0
        %875 = vmatpush.msra.mxu0 0.0
        %876 = vmatpush.msra.mxu0 0.0
        %877 = vmatpush.msra.mxu0 0.0
        %878 = vmatpush.msra.mxu0 0.0
        %879 = vmatpush.msra.mxu0 0.0
        %880 = vmatpush.msra.mxu0 0.0
        %881 = vmatpush.msra.mxu0 0.0
        %882 = vmatpush.msra.mxu0 %v230
        %883 = vmatpush.msra.mxu0 %v229
        %884 = vmatmul.f32.gmra.mxu0 %v866
        %v885 = vpop.f32.mrf.mxu0
        %v886 = vadd.f32 0.0, %v885
        %887 = vdwg.mxu0
        %v888 = vsel %vm346, %v743, 0
        %890 = vmatpush.msra.mxu0 0.0
        %891 = vmatpush.msra.mxu0 0.0
        %892 = vmatpush.msra.mxu0 0.0
        %893 = vmatpush.msra.mxu0 0.0
        %894 = vmatpush.msra.mxu0 0.0
        %895 = vmatpush.msra.mxu0 0.0
        %896 = vmatpush.msra.mxu0 0.0
        %897 = vmatpush.msra.mxu0 0.0
        %898 = vmatpush.msra.mxu0 0.0
        %899 = vmatpush.msra.mxu0 0.0
        %900 = vmatpush.msra.mxu0 0.0
        %901 = vmatpush.msra.mxu0 0.0
        %902 = vmatpush.msra.mxu0 0.0
        %903 = vmatpush.msra.mxu0 0.0
        %904 = vmatpush.msra.mxu0 %v232
        %905 = vmatpush.msra.mxu0 %v231
        %906 = vmatmul.f32.gmra.mxu0 %v888
        %v907 = vpop.f32.mrf.mxu0
        %v908 = vadd.f32 0.0, %v907
        %909 = vdwg.mxu0
        %v910 = vsel %vm346, %v746, 0
        %912 = vmatpush.msra.mxu0 0.0
        %913 = vmatpush.msra.mxu0 0.0
        %914 = vmatpush.msra.mxu0 0.0
        %915 = vmatpush.msra.mxu0 0.0
        %916 = vmatpush.msra.mxu0 0.0
        %917 = vmatpush.msra.mxu0 0.0
        %918 = vmatpush.msra.mxu0 0.0
        %919 = vmatpush.msra.mxu0 0.0
        %920 = vmatpush.msra.mxu0 0.0
        %921 = vmatpush.msra.mxu0 0.0
        %922 = vmatpush.msra.mxu0 0.0
        %923 = vmatpush.msra.mxu0 0.0
        %924 = vmatpush.msra.mxu0 0.0
        %925 = vmatpush.msra.mxu0 0.0
        %926 = vmatpush.msra.mxu0 %v234
        %927 = vmatpush.msra.mxu0 %v233
        %928 = vmatmul.f32.gmra.mxu0 %v910
        %v929 = vpop.f32.mrf.mxu0
        %v930 = vadd.f32 0.0, %v929
        %931 = vdwg.mxu0
        %v940 = vrot.slane %v798, 7
        %v941 = vsel %vm331, %v940, %v776
        %v942 = vrot.slane %v820, 6
        %v943 = vsel %vm333, %v942, %v941
        %v944 = vrot.slane %v842, 5
        %v945 = vsel %vm335, %v944, %v943
        %v946 = vrot.slane %v864, 4
        %v947 = vsel %vm337, %v946, %v945
        %v948 = vrot.slane %v886, 3
        %v949 = vsel %vm339, %v948, %v947
        %v950 = vrot.slane %v908, 2
        %v951 = vsel %vm341, %v950, %v949
        %v952 = vrot.slane %v930, 1
        %v953 = vsel %vm343, %v952, %v951
        %955 = vst [vmem:[%s210] sm:$0xff] %v953
        %s956 = sand.u32 %s80, 1
        %s957 = scalar_lea.sflag [#allocation4], %s956
        %s958 = sand.u32 %s80, 1
        %s959 = smul.addr %s958, 8
        %s960 = scalar_lea.vmem [#allocation7], %s959
        %s961 = sand.u32 %s106, 1
        %s962 = scalar_lea.sflag [#allocation9], %s961
        %s963 = sand.u32 %s106, 1
        %s964 = smul.addr %s963, 8
        %s965 = scalar_lea.vmem [#allocation8], %s964
        // Predicated region
        $region37: #{tpu_custom_call.1} parent=27 // pred_check
          %p966 = pneg %p90
        $region38: #{tpu_custom_call.1} parent=27 // pred_check_branch
          %968 = sbr.rel (%p966) target = $region40
        $region39: #{tpu_custom_call.1} parent=27 // pred_region
          %970 = vsyncadd %s957, 0
          %s971 = smul.addr %s25, 8
          %s972 = scalar_lea.hbm %s2, %s971
          %s974 = sshll.u32 %s960, 4
          %s975 = int_to_ptr.vmem [resolvable:$true] %s974
          %s976 = sshll.u32 %s972, 4
          %s977 = int_to_ptr.hbm [resolvable:$true] %s976
          %979 = dma.vmem_to_hbm [thread:$0]  %s975, 128, %s977, %s957
        $region40: #{tpu_custom_call.1} parent=27 // pred_fallthru
          _
        // Predicated region
        $region41: #{tpu_custom_call.1} parent=27 // pred_check
          %p980 = pneg %p116
        $region42: #{tpu_custom_call.1} parent=27 // pred_check_branch
          %982 = sbr.rel (%p980) target = $region44
        $region43: #{tpu_custom_call.1} parent=27 // pred_region
          %984 = vsyncadd %s962, 0
          %s985 = smul.addr %s25, 8
          %s986 = scalar_lea.hbm %s3, %s985
          %s988 = sshll.u32 %s965, 4
          %s989 = int_to_ptr.vmem [resolvable:$true] %s988
          %s990 = sshll.u32 %s986, 4
          %s991 = int_to_ptr.hbm [resolvable:$true] %s990
          %993 = dma.vmem_to_hbm [thread:$0]  %s989, 128, %s991, %s962
        $region44: #{tpu_custom_call.1} parent=27 // pred_fallthru
          _
      $region28: #{tpu_custom_call.1} parent=5 // pred_fallthru
        _
      %p994 = scmp.le.s32.totalorder 2, %s20
      // Predicated region
      $region45: #{tpu_custom_call.1} parent=5 // pred_check
        %p995 = pneg %p994
      $region46: #{tpu_custom_call.1} parent=5 // pred_check_branch
        %997 = sbr.rel (%p995) target = $region48
      $region47: #{tpu_custom_call.1} parent=5 // pred_region
        %s998 = ssub.s32 %s20, 2
        // Predicated region
        $region49: #{tpu_custom_call.1} parent=47 // pred_check
          %p999 = pneg %p96
        $region50: #{tpu_custom_call.1} parent=47 // pred_check_branch
          %1001 = sbr.rel (%p999) target = $region52
        $region51: #{tpu_custom_call.1} parent=47 // pred_region
          %s1002 = sand.u32 %s81, 1
          %s1003 = scalar_lea.sflag [#allocation4], %s1002
          %s1004 = sand.u32 %s81, 1
          %s1005 = smul.addr %s1004, 8
          %s1006 = scalar_lea.vmem [#allocation7], %s1005
          %1008 = dma.done %s1003, 128
        $region52: #{tpu_custom_call.1} parent=47 // pred_fallthru
          _
        // Predicated region
        $region53: #{tpu_custom_call.1} parent=47 // pred_check
          %p1009 = pneg %p122
        $region54: #{tpu_custom_call.1} parent=47 // pred_check_branch
          %1011 = sbr.rel (%p1009) target = $region56
        $region55: #{tpu_custom_call.1} parent=47 // pred_region
          %s1012 = sand.u32 %s107, 1
          %s1013 = scalar_lea.sflag [#allocation9], %s1012
          %s1014 = sand.u32 %s107, 1
          %s1015 = smul.addr %s1014, 8
          %s1016 = scalar_lea.vmem [#allocation8], %s1015
          %1018 = dma.done %s1013, 128
        $region56: #{tpu_custom_call.1} parent=47 // pred_fallthru
          _
      $region48: #{tpu_custom_call.1} parent=5 // pred_fallthru
        _
    $region6: #{tpu_custom_call.1} parent=1 // loop_footer
      %s24 = sadd.s32 1, %s20
    $region7: #{tpu_custom_call.1} parent=1 // loop_footer_branch
      %19 = sbr.rel target = $region3
    $region8: #{tpu_custom_call.1} parent=1 // loop_exit
      _
    %1019 = vsyncpa [#allocation3], 1
    %s1020 = scalar_lea.sflag [#allocation3], 1
    %1021 = vsyncpa %s1020, 1
    %1022 = vsyncpa [#allocation6], 1
    %1023 = vsyncpa [#allocation4], 1
    %s1024 = scalar_lea.sflag [#allocation4], 1
    %1025 = vsyncpa %s1024, 1
    %1026 = vsyncpa [#allocation9], 1
    %s1027 = scalar_lea.sflag [#allocation9], 1
    %1028 = vsyncpa %s1027, 1

</llo_original>
